<compile_context>
chip_gen: v7x
topology: tpu7x:2x2x1
jax: 0.10.0
libtpu: 0.0.40
codegen_flags: <defaults>
</compile_context>

<pallas_src>
import functools

import jax
import jax.numpy as jnp
from jax.experimental import pallas as pl
from jax.experimental.pallas import tpu as pltpu


def _round_up(n, m):
    return ((n + m - 1) // m) * m


def _fused_kernel(x_ref, w_ref, out_ref, *, layout, total_pad):
    """x_ref: (TB, G), w_ref: (G, totalW), out_ref: (TB, total_pad).

    layout: static tuple of (w_off, o_off, d) per irrep.  Weight columns
    [w_off, w_off + 2*d*d) hold, row-major over i, the pair
    [wre_ext[:, i, :], wim_ext[:, i, :]], so the projection slice directly
    gives Mre / Mim rows without any in-kernel reshape.
    """
    # Single MXU pass: projections (real and imag) of every irrep at once.
    m = jnp.dot(x_ref[...], w_ref[...], preferred_element_type=jnp.float32)
    tb = m.shape[0]

    cols = []
    for w_off, _o_off, d in layout:
        td = 2 * d
        re = [m[:, w_off + i * td: w_off + i * td + d] for i in range(d)]      # Mre[:, i, :]
        im = [m[:, w_off + i * td + d: w_off + (i + 1) * td] for i in range(d)]  # Mim[:, i, :]

        # R is Hermitian: compute the upper triangle only, mirror the rest.
        rre, rim = {}, {}
        for i in range(d):
            for k in range(i, d):
                rr = jnp.sum(re[i] * re[k] + im[i] * im[k], axis=-1, keepdims=True)  # (TB,1)
                rre[(i, k)] = rr
                rre[(k, i)] = rr
                if k == i:
                    rim[(i, i)] = jnp.zeros((tb, 1), jnp.float32)
                else:
                    ri = jnp.sum(im[i] * re[k] - re[i] * im[k], axis=-1, keepdims=True)
                    rim[(i, k)] = ri
                    rim[(k, i)] = -ri
        cols.extend(rre[(i, k)] for i in range(d) for k in range(d))
        cols.extend(rim[(i, k)] for i in range(d) for k in range(d))

    pad = total_pad - sum(2 * d * d for _, _, d in layout)
    if pad:
        cols.append(jnp.zeros((tb, pad), jnp.float32))
    # Single lane-dense full-tile store.
    out_ref[...] = jnp.concatenate(cols, axis=-1)


def pack_weights(weights, group_order):
    """pad_eye + real/imag split + flatten + concat across irreps (done ONCE).

    weights: list of (G-1, d_i, d_i, 2) float32 arrays (torch view_as_complex
    layout).  Returns (W_all (G, total) float32, layout, total).
    """
    G = group_order
    cols, layout = [], []
    w_off = o_off = 0
    for W_i in weights:
        d = W_i.shape[-2]
        w_re, w_im = W_i[..., 0], W_i[..., 1]
        eye = jnp.eye(d, dtype=jnp.float32)
        wre_ext = jnp.concatenate([eye[None], w_re], axis=0)                          # (G,d,d)
        wim_ext = jnp.concatenate([jnp.zeros((1, d, d), jnp.float32), w_im], axis=0)  # (G,d,d)
        # Row-interleaved packing: column block i holds [wre_ext[:,i,:], wim_ext[:,i,:]].
        wp = jnp.concatenate([wre_ext, wim_ext], axis=-1).reshape(G, 2 * d * d)
        cols.append(wp)
        layout.append((w_off, o_off, d))
        w_off += 2 * d * d
        o_off += 2 * d * d
    return jnp.concatenate(cols, axis=-1), tuple(layout), o_off


@functools.partial(jax.jit, static_argnames=("layout", "total"))
def spectral_forward(x, w_all, layout, total):
    """x: (B, G) float32, w_all: (G, totalW) float32 (from pack_weights).

    Returns a list of (R_re, R_im) pairs, each (B, d_i, d_i) float32,
    equivalent to the complex outputs of spectral_net.forward.
    """
    B, G = x.shape
    total_w = w_all.shape[-1]
    total_pad = _round_up(total, 128)           # lane-dense output slab

    TB = min(_round_up(B, 8), 256)              # batch tile (sublane-aligned)
    B_pad = _round_up(B, TB)
    if B_pad != B:
        x = jnp.pad(x, ((0, B_pad - B), (0, 0)))

    out = pl.pallas_call(
        functools.partial(_fused_kernel, layout=layout, total_pad=total_pad),
        out_shape=jax.ShapeDtypeStruct((B_pad, total_pad), jnp.float32),
        grid_spec=pltpu.PrefetchScalarGridSpec(
            num_scalar_prefetch=0,
            grid=(B_pad // TB,),
            in_specs=[pl.BlockSpec((TB, G), lambda b: (b, 0)),
                      pl.BlockSpec((G, total_w), lambda b: (0, 0))],
            out_specs=pl.BlockSpec((TB, total_pad), lambda b: (b, 0)),
        ),
        compiler_params=pltpu.CompilerParams(
            dimension_semantics=("parallel",)),
    )(x, w_all)

    # Unpack the flat slab into per-irrep complex matrices (free layout plumbing).
    res = []
    for _w_off, o_off, d in layout:
        dd = d * d
        res.append((out[:B, o_off:o_off + dd].reshape(B, d, d),
                    out[:B, o_off + dd:o_off + 2 * dd].reshape(B, d, d)))
    return res


def spectral_net_forward(x, weights):
    """Convenience wrapper: pack weights then run the fused kernel."""
    G = x.shape[1]
    w_all, layout, total = pack_weights(weights, G)
    return spectral_forward(x, w_all, layout, total)


if __name__ == "__main__":
    group_order = 8
    irrep_dims = [2, 4]
    B = 4

    key = jax.random.PRNGKey(0)
    keys = jax.random.split(key, 1 + len(irrep_dims))
    x = jax.random.normal(keys[0], (B, group_order), dtype=jnp.float32)

    # Deterministic parameter init, mirroring W_i.uniform_(-1/d, 1/d).
    weights = []
    for d, kw in zip(irrep_dims, keys[1:]):
        k = 1.0 / d
        W_i = jax.random.uniform(kw, (group_order - 1, d, d, 2),
                                 dtype=jnp.float32, minval=-k, maxval=k)
        weights.append(W_i)

    # Weight prep (pad_eye / flatten / concat) runs once, outside the hot path.
    w_all, layout, total = pack_weights(weights, group_order)
    w_all = jax.block_until_ready(w_all)

    outs = spectral_forward(x, w_all, layout, total)
    outs = jax.block_until_ready(outs)

    # Pure-JAX complex reference (same math as the PyTorch module).
    ok = True
    for W_i, (r_re, r_im) in zip(weights, outs):
        d = W_i.shape[-2]
        Wcm = W_i[..., 0] + 1j * W_i[..., 1]                      # (G-1, d, d) complex
        eyecm = jnp.eye(d, dtype=jnp.complex64)
        W_ext = jnp.concatenate([eyecm[None], Wcm], axis=0)       # (G, d, d)
        M = jnp.einsum('bg,gij->bij', x.astype(jnp.complex64), W_ext)
        R = jnp.einsum('bij,bkj->bik', M, jnp.conj(M))            # M @ conj(M)^T
        ok &= bool(jnp.allclose(r_re, R.real, atol=1e-4, rtol=1e-4))
        ok &= bool(jnp.allclose(r_im, R.imag, atol=1e-4, rtol=1e-4))

    if ok:
        print("KERNEL_OK")
    else:
        print("MISMATCH")
</pallas_src>

<mosaic_0001>
module attributes {stable_mosaic.version = 11 : i64} {
  func.func @_fused_kernel(%arg0: i32, %arg1: memref<8x8xf32, #tpu.memory_space<vmem>>, %arg2: memref<8x40xf32, #tpu.memory_space<vmem>>, %arg3: memref<8x128xf32, #tpu.memory_space<vmem>>) attributes {dimension_semantics = [#tpu.dimension_semantics<parallel>], iteration_bounds = array<i64: 1>, scalar_prefetch = 0 : i64, scratch_operands = 0 : i64, tpu.core_type = #tpu.core_type<tc>, window_params = [{transform_indices = @transform_0, window_bounds = array<i64: 8, 8>}, {pipeline_mode = #tpu.pipeline_mode<synchronous>, transform_indices = @transform_1, window_bounds = array<i64: 8, 40>}, {transform_indices = @transform_2, window_bounds = array<i64: 8, 128>}]} {
    %c0 = arith.constant 0 : index
    %c0_0 = arith.constant 0 : index
    %0 = vector.load %arg1[%c0, %c0_0] : memref<8x8xf32, #tpu.memory_space<vmem>>, vector<8x8xf32>
    %c0_1 = arith.constant 0 : index
    %c0_2 = arith.constant 0 : index
    %1 = vector.load %arg2[%c0_1, %c0_2] : memref<8x40xf32, #tpu.memory_space<vmem>>, vector<8x40xf32>
    %cst = arith.constant dense<0.000000e+00> : vector<8x40xf32>
    %2 = tpu.matmul %0, %1, %cst {dimension_numbers = #tpu.dot_dimension_numbers<[1], [0], [0], [1], [0, 0, 1, 1], [], []>} : vector<8x8xf32>, vector<8x40xf32>, vector<8x40xf32> -> vector<8x40xf32>
    %3 = vector.extract_strided_slice %2 {offsets = [0, 0], sizes = [8, 2], strides = [1, 1]} : vector<8x40xf32> to vector<8x2xf32>
    %4 = vector.extract_strided_slice %2 {offsets = [0, 4], sizes = [8, 2], strides = [1, 1]} : vector<8x40xf32> to vector<8x2xf32>
    %5 = vector.extract_strided_slice %2 {offsets = [0, 2], sizes = [8, 2], strides = [1, 1]} : vector<8x40xf32> to vector<8x2xf32>
    %6 = vector.extract_strided_slice %2 {offsets = [0, 6], sizes = [8, 2], strides = [1, 1]} : vector<8x40xf32> to vector<8x2xf32>
    %7 = arith.mulf %3, %3 : vector<8x2xf32>
    %8 = arith.mulf %5, %5 : vector<8x2xf32>
    %9 = arith.addf %7, %8 : vector<8x2xf32>
    %cst_3 = arith.constant dense<0.000000e+00> : vector<8xf32>
    %10 = vector.multi_reduction <add>, %9, %cst_3 [1] : vector<8x2xf32> to vector<8xf32>
    %11 = vector.shape_cast %10 : vector<8xf32> to vector<8x1xf32>
    %cst_4 = arith.constant 0.000000e+00 : f32
    %12 = vector.broadcast %cst_4 : f32 to vector<8x1xf32>
    %13 = arith.mulf %3, %4 : vector<8x2xf32>
    %14 = arith.mulf %5, %6 : vector<8x2xf32>
    %15 = arith.addf %13, %14 : vector<8x2xf32>
    %cst_5 = arith.constant dense<0.000000e+00> : vector<8xf32>
    %16 = vector.multi_reduction <add>, %15, %cst_5 [1] : vector<8x2xf32> to vector<8xf32>
    %17 = vector.shape_cast %16 : vector<8xf32> to vector<8x1xf32>
    %18 = arith.mulf %5, %4 : vector<8x2xf32>
    %19 = arith.mulf %3, %6 : vector<8x2xf32>
    %20 = arith.subf %18, %19 : vector<8x2xf32>
    %cst_6 = arith.constant dense<0.000000e+00> : vector<8xf32>
    %21 = vector.multi_reduction <add>, %20, %cst_6 [1] : vector<8x2xf32> to vector<8xf32>
    %22 = vector.shape_cast %21 : vector<8xf32> to vector<8x1xf32>
    %cst_7 = arith.constant 0.000000e+00 : f32
    %23 = vector.broadcast %cst_7 : f32 to vector<8x1xf32>
    %24 = arith.subf %23, %22 : vector<8x1xf32>
    %25 = arith.mulf %4, %4 : vector<8x2xf32>
    %26 = arith.mulf %6, %6 : vector<8x2xf32>
    %27 = arith.addf %25, %26 : vector<8x2xf32>
    %cst_8 = arith.constant dense<0.000000e+00> : vector<8xf32>
    %28 = vector.multi_reduction <add>, %27, %cst_8 [1] : vector<8x2xf32> to vector<8xf32>
    %29 = vector.shape_cast %28 : vector<8xf32> to vector<8x1xf32>
    %cst_9 = arith.constant 0.000000e+00 : f32
    %30 = vector.broadcast %cst_9 : f32 to vector<8x1xf32>
    %31 = vector.extract_strided_slice %2 {offsets = [0, 8], sizes = [8, 4], strides = [1, 1]} : vector<8x40xf32> to vector<8x4xf32>
    %32 = vector.extract_strided_slice %2 {offsets = [0, 16], sizes = [8, 4], strides = [1, 1]} : vector<8x40xf32> to vector<8x4xf32>
    %33 = vector.extract_strided_slice %2 {offsets = [0, 24], sizes = [8, 4], strides = [1, 1]} : vector<8x40xf32> to vector<8x4xf32>
    %34 = vector.extract_strided_slice %2 {offsets = [0, 32], sizes = [8, 4], strides = [1, 1]} : vector<8x40xf32> to vector<8x4xf32>
    %35 = vector.extract_strided_slice %2 {offsets = [0, 12], sizes = [8, 4], strides = [1, 1]} : vector<8x40xf32> to vector<8x4xf32>
    %36 = vector.extract_strided_slice %2 {offsets = [0, 20], sizes = [8, 4], strides = [1, 1]} : vector<8x40xf32> to vector<8x4xf32>
    %37 = vector.extract_strided_slice %2 {offsets = [0, 28], sizes = [8, 4], strides = [1, 1]} : vector<8x40xf32> to vector<8x4xf32>
    %38 = vector.extract_strided_slice %2 {offsets = [0, 36], sizes = [8, 4], strides = [1, 1]} : vector<8x40xf32> to vector<8x4xf32>
    %39 = arith.mulf %31, %31 : vector<8x4xf32>
    %40 = arith.mulf %35, %35 : vector<8x4xf32>
    %41 = arith.addf %39, %40 : vector<8x4xf32>
    %cst_10 = arith.constant dense<0.000000e+00> : vector<8xf32>
    %42 = vector.multi_reduction <add>, %41, %cst_10 [1] : vector<8x4xf32> to vector<8xf32>
    %43 = vector.shape_cast %42 : vector<8xf32> to vector<8x1xf32>
    %cst_11 = arith.constant 0.000000e+00 : f32
    %44 = vector.broadcast %cst_11 : f32 to vector<8x1xf32>
    %45 = arith.mulf %31, %32 : vector<8x4xf32>
    %46 = arith.mulf %35, %36 : vector<8x4xf32>
    %47 = arith.addf %45, %46 : vector<8x4xf32>
    %cst_12 = arith.constant dense<0.000000e+00> : vector<8xf32>
    %48 = vector.multi_reduction <add>, %47, %cst_12 [1] : vector<8x4xf32> to vector<8xf32>
    %49 = vector.shape_cast %48 : vector<8xf32> to vector<8x1xf32>
    %50 = arith.mulf %35, %32 : vector<8x4xf32>
    %51 = arith.mulf %31, %36 : vector<8x4xf32>
    %52 = arith.subf %50, %51 : vector<8x4xf32>
    %cst_13 = arith.constant dense<0.000000e+00> : vector<8xf32>
    %53 = vector.multi_reduction <add>, %52, %cst_13 [1] : vector<8x4xf32> to vector<8xf32>
    %54 = vector.shape_cast %53 : vector<8xf32> to vector<8x1xf32>
    %cst_14 = arith.constant 0.000000e+00 : f32
    %55 = vector.broadcast %cst_14 : f32 to vector<8x1xf32>
    %56 = arith.subf %55, %54 : vector<8x1xf32>
    %57 = arith.mulf %31, %33 : vector<8x4xf32>
    %58 = arith.mulf %35, %37 : vector<8x4xf32>
    %59 = arith.addf %57, %58 : vector<8x4xf32>
    %cst_15 = arith.constant dense<0.000000e+00> : vector<8xf32>
    %60 = vector.multi_reduction <add>, %59, %cst_15 [1] : vector<8x4xf32> to vector<8xf32>
    %61 = vector.shape_cast %60 : vector<8xf32> to vector<8x1xf32>
    %62 = arith.mulf %35, %33 : vector<8x4xf32>
    %63 = arith.mulf %31, %37 : vector<8x4xf32>
    %64 = arith.subf %62, %63 : vector<8x4xf32>
    %cst_16 = arith.constant dense<0.000000e+00> : vector<8xf32>
    %65 = vector.multi_reduction <add>, %64, %cst_16 [1] : vector<8x4xf32> to vector<8xf32>
    %66 = vector.shape_cast %65 : vector<8xf32> to vector<8x1xf32>
    %cst_17 = arith.constant 0.000000e+00 : f32
    %67 = vector.broadcast %cst_17 : f32 to vector<8x1xf32>
    %68 = arith.subf %67, %66 : vector<8x1xf32>
    %69 = arith.mulf %31, %34 : vector<8x4xf32>
    %70 = arith.mulf %35, %38 : vector<8x4xf32>
    %71 = arith.addf %69, %70 : vector<8x4xf32>
    %cst_18 = arith.constant dense<0.000000e+00> : vector<8xf32>
    %72 = vector.multi_reduction <add>, %71, %cst_18 [1] : vector<8x4xf32> to vector<8xf32>
    %73 = vector.shape_cast %72 : vector<8xf32> to vector<8x1xf32>
    %74 = arith.mulf %35, %34 : vector<8x4xf32>
    %75 = arith.mulf %31, %38 : vector<8x4xf32>
    %76 = arith.subf %74, %75 : vector<8x4xf32>
    %cst_19 = arith.constant dense<0.000000e+00> : vector<8xf32>
    %77 = vector.multi_reduction <add>, %76, %cst_19 [1] : vector<8x4xf32> to vector<8xf32>
    %78 = vector.shape_cast %77 : vector<8xf32> to vector<8x1xf32>
    %cst_20 = arith.constant 0.000000e+00 : f32
    %79 = vector.broadcast %cst_20 : f32 to vector<8x1xf32>
    %80 = arith.subf %79, %78 : vector<8x1xf32>
    %81 = arith.mulf %32, %32 : vector<8x4xf32>
    %82 = arith.mulf %36, %36 : vector<8x4xf32>
    %83 = arith.addf %81, %82 : vector<8x4xf32>
    %cst_21 = arith.constant dense<0.000000e+00> : vector<8xf32>
    %84 = vector.multi_reduction <add>, %83, %cst_21 [1] : vector<8x4xf32> to vector<8xf32>
    %85 = vector.shape_cast %84 : vector<8xf32> to vector<8x1xf32>
    %cst_22 = arith.constant 0.000000e+00 : f32
    %86 = vector.broadcast %cst_22 : f32 to vector<8x1xf32>
    %87 = arith.mulf %32, %33 : vector<8x4xf32>
    %88 = arith.mulf %36, %37 : vector<8x4xf32>
    %89 = arith.addf %87, %88 : vector<8x4xf32>
    %cst_23 = arith.constant dense<0.000000e+00> : vector<8xf32>
    %90 = vector.multi_reduction <add>, %89, %cst_23 [1] : vector<8x4xf32> to vector<8xf32>
    %91 = vector.shape_cast %90 : vector<8xf32> to vector<8x1xf32>
    %92 = arith.mulf %36, %33 : vector<8x4xf32>
    %93 = arith.mulf %32, %37 : vector<8x4xf32>
    %94 = arith.subf %92, %93 : vector<8x4xf32>
    %cst_24 = arith.constant dense<0.000000e+00> : vector<8xf32>
    %95 = vector.multi_reduction <add>, %94, %cst_24 [1] : vector<8x4xf32> to vector<8xf32>
    %96 = vector.shape_cast %95 : vector<8xf32> to vector<8x1xf32>
    %cst_25 = arith.constant 0.000000e+00 : f32
    %97 = vector.broadcast %cst_25 : f32 to vector<8x1xf32>
    %98 = arith.subf %97, %96 : vector<8x1xf32>
    %99 = arith.mulf %32, %34 : vector<8x4xf32>
    %100 = arith.mulf %36, %38 : vector<8x4xf32>
    %101 = arith.addf %99, %100 : vector<8x4xf32>
    %cst_26 = arith.constant dense<0.000000e+00> : vector<8xf32>
    %102 = vector.multi_reduction <add>, %101, %cst_26 [1] : vector<8x4xf32> to vector<8xf32>
    %103 = vector.shape_cast %102 : vector<8xf32> to vector<8x1xf32>
    %104 = arith.mulf %36, %34 : vector<8x4xf32>
    %105 = arith.mulf %32, %38 : vector<8x4xf32>
    %106 = arith.subf %104, %105 : vector<8x4xf32>
    %cst_27 = arith.constant dense<0.000000e+00> : vector<8xf32>
    %107 = vector.multi_reduction <add>, %106, %cst_27 [1] : vector<8x4xf32> to vector<8xf32>
    %108 = vector.shape_cast %107 : vector<8xf32> to vector<8x1xf32>
    %cst_28 = arith.constant 0.000000e+00 : f32
    %109 = vector.broadcast %cst_28 : f32 to vector<8x1xf32>
    %110 = arith.subf %109, %108 : vector<8x1xf32>
    %111 = arith.mulf %33, %33 : vector<8x4xf32>
    %112 = arith.mulf %37, %37 : vector<8x4xf32>
    %113 = arith.addf %111, %112 : vector<8x4xf32>
    %cst_29 = arith.constant dense<0.000000e+00> : vector<8xf32>
    %114 = vector.multi_reduction <add>, %113, %cst_29 [1] : vector<8x4xf32> to vector<8xf32>
    %115 = vector.shape_cast %114 : vector<8xf32> to vector<8x1xf32>
    %cst_30 = arith.constant 0.000000e+00 : f32
    %116 = vector.broadcast %cst_30 : f32 to vector<8x1xf32>
    %117 = arith.mulf %33, %34 : vector<8x4xf32>
    %118 = arith.mulf %37, %38 : vector<8x4xf32>
    %119 = arith.addf %117, %118 : vector<8x4xf32>
    %cst_31 = arith.constant dense<0.000000e+00> : vector<8xf32>
    %120 = vector.multi_reduction <add>, %119, %cst_31 [1] : vector<8x4xf32> to vector<8xf32>
    %121 = vector.shape_cast %120 : vector<8xf32> to vector<8x1xf32>
    %122 = arith.mulf %37, %34 : vector<8x4xf32>
    %123 = arith.mulf %33, %38 : vector<8x4xf32>
    %124 = arith.subf %122, %123 : vector<8x4xf32>
    %cst_32 = arith.constant dense<0.000000e+00> : vector<8xf32>
    %125 = vector.multi_reduction <add>, %124, %cst_32 [1] : vector<8x4xf32> to vector<8xf32>
    %126 = vector.shape_cast %125 : vector<8xf32> to vector<8x1xf32>
    %cst_33 = arith.constant 0.000000e+00 : f32
    %127 = vector.broadcast %cst_33 : f32 to vector<8x1xf32>
    %128 = arith.subf %127, %126 : vector<8x1xf32>
    %129 = arith.mulf %34, %34 : vector<8x4xf32>
    %130 = arith.mulf %38, %38 : vector<8x4xf32>
    %131 = arith.addf %129, %130 : vector<8x4xf32>
    %cst_34 = arith.constant dense<0.000000e+00> : vector<8xf32>
    %132 = vector.multi_reduction <add>, %131, %cst_34 [1] : vector<8x4xf32> to vector<8xf32>
    %133 = vector.shape_cast %132 : vector<8xf32> to vector<8x1xf32>
    %cst_35 = arith.constant 0.000000e+00 : f32
    %134 = vector.broadcast %cst_35 : f32 to vector<8x1xf32>
    %cst_36 = arith.constant 0.000000e+00 : f32
    %135 = vector.broadcast %cst_36 : f32 to vector<8x88xf32>
    %136 = tpu.concatenate %11, %17, %17, %29, %12, %22, %24, %30, %43, %49, %61, %73, %49, %85, %91, %103 in 1 : vector<8x1xf32>, vector<8x1xf32>, vector<8x1xf32>, vector<8x1xf32>, vector<8x1xf32>, vector<8x1xf32>, vector<8x1xf32>, vector<8x1xf32>, vector<8x1xf32>, vector<8x1xf32>, vector<8x1xf32>, vector<8x1xf32>, vector<8x1xf32>, vector<8x1xf32>, vector<8x1xf32>, vector<8x1xf32> -> vector<8x16xf32>
    %137 = tpu.concatenate %61, %91, %115, %121, %73, %103, %121, %133, %44, %54, %66, %78, %56, %86, %96, %108 in 1 : vector<8x1xf32>, vector<8x1xf32>, vector<8x1xf32>, vector<8x1xf32>, vector<8x1xf32>, vector<8x1xf32>, vector<8x1xf32>, vector<8x1xf32>, vector<8x1xf32>, vector<8x1xf32>, vector<8x1xf32>, vector<8x1xf32>, vector<8x1xf32>, vector<8x1xf32>, vector<8x1xf32>, vector<8x1xf32> -> vector<8x16xf32>
    %138 = tpu.concatenate %68, %98, %116, %126, %80, %110, %128, %134, %135 in 1 : vector<8x1xf32>, vector<8x1xf32>, vector<8x1xf32>, vector<8x1xf32>, vector<8x1xf32>, vector<8x1xf32>, vector<8x1xf32>, vector<8x1xf32>, vector<8x88xf32> -> vector<8x96xf32>
    %139 = tpu.concatenate %136, %137, %138 in 1 : vector<8x16xf32>, vector<8x16xf32>, vector<8x96xf32> -> vector<8x128xf32>
    %c0_37 = arith.constant 0 : index
    %c0_38 = arith.constant 0 : index
    %140 = vector.load %arg3[%c0_37, %c0_38] : memref<8x128xf32, #tpu.memory_space<vmem>>, vector<8x128xf32>
    tpu.vector_store %arg3[%c0_37, %c0_38], %139 {strides = array<i32>} : memref<8x128xf32, #tpu.memory_space<vmem>>, vector<8x128xf32>,
    return
  }
  func.func @transform_0(%arg0: i32) -> (i32, i32) {
    %c0_i32 = arith.constant 0 : i32
    %c0_i32_0 = arith.constant 0 : i32
    return %arg0, %c0_i32 : i32, i32
  }
  func.func @transform_1(%arg0: i32) -> (i32, i32) {
    %c0_i32 = arith.constant 0 : i32
    %c0_i32_0 = arith.constant 0 : i32
    %c0_i32_1 = arith.constant 0 : i32
    return %c0_i32, %c0_i32_0 : i32, i32
  }
  func.func @transform_2(%arg0: i32) -> (i32, i32) {
    %c0_i32 = arith.constant 0 : i32
    %c0_i32_0 = arith.constant 0 : i32
    return %arg0, %c0_i32 : i32, i32
  }
}

</mosaic_0001>

<llo_original>
// kernel: spectral_forward.1
$region0: #{spectral_forward.1}
  #allocation0 [shape = 'u32[]', space=smem, size = 0x4, offset = 0x4, fixed_abs, tag = 'smem constant byte address 0x4 - core index']
  #allocation1 [shape = 'u32[144,128]{1,0:T(1,128)}', space=vmem, size = 0x12000, scoped, tag = 'internal scratch']
  %s0 = inlined_call_operand.vmem [shape: f32[8,8], index: 0, kind: input, shape index: {}]
  %s1 = inlined_call_operand.vmem [shape: f32[8,40], index: 1, kind: input, shape index: {}]
  %s2 = inlined_call_operand.vmem [shape: f32[8,128], index: 2, kind: output, shape index: {}]
  %s3 = sld [smem:[#allocation0]]
  $region18: #{spectral_forward.1} parent=0
    _
  %s5 = ssub.s32 1, %s3
  %s6 = scalar_select 0, %s5, %s3
  // Predicated region
  $region2: #{spectral_forward.1} parent=0 // pred_check
    _
  $region3: #{spectral_forward.1} parent=0 // pred_check_branch
    %8 = sbr.rel (0) target = $region5
  $region4: #{spectral_forward.1} parent=0 // pred_region
    _
  $region5: #{spectral_forward.1} parent=0 // pred_fallthru
    _
  // Predicated region
  $region6: #{spectral_forward.1} parent=0 // pred_check
    _
  $region7: #{spectral_forward.1} parent=0 // pred_check_branch
    %10 = sbr.rel (0) target = $region9
  $region8: #{spectral_forward.1} parent=0 // pred_region
    _
  $region9: #{spectral_forward.1} parent=0 // pred_fallthru
    _
  %v11 = vld [vmem:[%s0] sm:$0xff]
  %v12 = vld [vmem:[%s1] sm:$0xff]
  %vm13 = vcmask 64512
  %v15 = vsel %vm13, %v11, 0
  %17 = vmatprep.subr.mxu0 0.0
  %18 = vmatpush1.msra.mxu0 %v12
  %19 = vmatprep.subr.mxu0 0.0
  %20 = vmatpush1.msra.mxu0 0.0
  %21 = vmatprep.subr.mxu0 0.0
  %22 = vmatpush1.msra.mxu0 0.0
  %23 = vmatprep.subr.mxu0 0.0
  %24 = vmatpush1.msra.mxu0 0.0
  %25 = vmatprep.subr.mxu0 0.0
  %26 = vmatpush1.msra.mxu0 0.0
  %27 = vmatprep.subr.mxu0 0.0
  %28 = vmatpush1.msra.mxu0 0.0
  %29 = vmatprep.subr.mxu0 0.0
  %30 = vmatpush1.msra.mxu0 0.0
  %31 = vmatprep.subr.mxu0 0.0
  %32 = vmatpush1.msra.mxu0 0.0
  %33 = vmatprep.subr.mxu0 0.0
  %34 = vmatpush1.msra.mxu0 0.0
  %35 = vmatprep.subr.mxu0 0.0
  %36 = vmatpush1.msra.mxu0 0.0
  %37 = vmatprep.subr.mxu0 0.0
  %38 = vmatpush1.msra.mxu0 0.0
  %39 = vmatprep.subr.mxu0 0.0
  %40 = vmatpush1.msra.mxu0 0.0
  %41 = vmatprep.subr.mxu0 0.0
  %42 = vmatpush1.msra.mxu0 0.0
  %43 = vmatprep.subr.mxu0 0.0
  %44 = vmatpush1.msra.mxu0 0.0
  %45 = vmatprep.subr.mxu0 0.0
  %46 = vmatpush1.msra.mxu0 0.0
  %47 = vmatprep.subr.mxu0 0.0
  %48 = vmatpush1.msra.mxu0 0.0
  %49 = vmatprep.subr.mxu0 0.0
  %50 = vmatpush1.msra.mxu0 0.0
  %51 = vmatprep.subr.mxu0 0.0
  %52 = vmatpush1.msra.mxu0 0.0
  %53 = vmatprep.subr.mxu0 0.0
  %54 = vmatpush1.msra.mxu0 0.0
  %55 = vmatprep.subr.mxu0 0.0
  %56 = vmatpush1.msra.mxu0 0.0
  %57 = vmatprep.subr.mxu0 0.0
  %58 = vmatpush1.msra.mxu0 0.0
  %59 = vmatprep.subr.mxu0 0.0
  %60 = vmatpush1.msra.mxu0 0.0
  %61 = vmatprep.subr.mxu0 0.0
  %62 = vmatpush1.msra.mxu0 0.0
  %63 = vmatprep.subr.mxu0 0.0
  %64 = vmatpush1.msra.mxu0 0.0
  %65 = vmatprep.subr.mxu0 0.0
  %66 = vmatpush1.msra.mxu0 0.0
  %67 = vmatprep.subr.mxu0 0.0
  %68 = vmatpush1.msra.mxu0 0.0
  %69 = vmatprep.subr.mxu0 0.0
  %70 = vmatpush1.msra.mxu0 0.0
  %71 = vmatprep.subr.mxu0 0.0
  %72 = vmatpush1.msra.mxu0 0.0
  %73 = vmatprep.subr.mxu0 0.0
  %74 = vmatpush1.msra.mxu0 0.0
  %75 = vmatprep.subr.mxu0 0.0
  %76 = vmatpush1.msra.mxu0 0.0
  %77 = vmatprep.subr.mxu0 0.0
  %78 = vmatpush1.msra.mxu0 0.0
  %79 = vmatprep.subr.mxu0 0.0
  %80 = vmatpush1.msra.mxu0 0.0
  %81 = vmatprep.mubr.f32.mxu0 0.0
  %82 = vmatmul.mubr.f32.gmra.mrb[0].mxu0 %v15
  %v83 = vpop.f32.mrb[0].mxu0
  %v84 = vadd.f32 0.0, %v83
  %v85 = vpop.f32.mrb[0].mxu0
  %86 = vdwg.mxu0
  %v87 = vmul.f32 %v84, %v84
  %89 = vrot.lane.b32.xlu0 %v87, 126
  %v90 = vpop.permute.xlu0 %89
  %v92 = vadd.f32 %v87, %v90
  %vm93 = vcmask 15360
  %v94 = vsel %vm93, %v92, 0.0
  %95 = vadd.xlane.f32.xlu0 %v94
  %v96 = vpop.xlane.xlu0 %95
  %98 = vrot.lane.b32.xlu0 %v84, 124
  %v99 = vpop.permute.xlu0 %98
  %v101 = vmul.f32 %v84, %v99
  %103 = vrot.lane.b32.xlu0 %v101, 126
  %v104 = vpop.permute.xlu0 %103
  %v106 = vadd.f32 %v101, %v104
  %v107 = vsel %vm93, %v106, 0.0
  %108 = vadd.xlane.f32.xlu0 %v107
  %v109 = vpop.xlane.xlu0 %108
  %110 = vrot.lane.b32.xlu0 %v84, 126
  %v111 = vpop.permute.xlu0 %110
  %v113 = vmul.f32 %v84, %v111
  %114 = vrot.lane.b32.xlu0 %v84, 122
  %v115 = vpop.permute.xlu0 %114
  %v117 = vmul.f32 %v84, %v115
  %119 = vrot.lane.b32.xlu0 %v117, 2
  %v120 = vpop.permute.xlu0 %119
  %v122 = vsub.f32 %v113, %v120
  %124 = vrot.lane.b32.xlu0 %v122, 126
  %v125 = vpop.permute.xlu0 %124
  %v127 = vsel %vm93, %v125, 0.0
  %128 = vadd.xlane.f32.xlu0 %v127
  %v129 = vpop.xlane.xlu0 %128
  %v130 = vsub.f32 0.0, %v129
  %132 = vrot.lane.b32.xlu0 %v92, 124
  %v133 = vpop.permute.xlu0 %132
  %v135 = vsel %vm93, %v133, 0.0
  %136 = vadd.xlane.f32.xlu0 %v135
  %v137 = vpop.xlane.xlu0 %136
  %138 = vrot.lane.b32.xlu0 %v87, 124
  %v139 = vpop.permute.xlu0 %138
  %v141 = vadd.f32 %v87, %v139
  %143 = vrot.lane.b32.xlu0 %v141, 120
  %v144 = vpop.permute.xlu0 %143
  %vm146 = vcmask 31744
  %v147 = vsel %vm146, %v144, 0.0
  %148 = vadd.xlane.f32.xlu0 %v147
  %v149 = vpop.xlane.xlu0 %148
  %150 = vrot.lane.b32.xlu0 %v84, 120
  %v151 = vpop.permute.xlu0 %150
  %v153 = vmul.f32 %v84, %v151
  %155 = vrot.lane.b32.xlu0 %v153, 124
  %v156 = vpop.permute.xlu0 %155
  %v158 = vadd.f32 %v153, %v156
  %160 = vrot.lane.b32.xlu0 %v158, 120
  %v161 = vpop.permute.xlu0 %160
  %v163 = vsel %vm146, %v161, 0.0
  %164 = vadd.xlane.f32.xlu0 %v163
  %v165 = vpop.xlane.xlu0 %164
  %166 = vrot.lane.b32.xlu0 %v84, 116
  %v167 = vpop.permute.xlu0 %166
  %v169 = vmul.f32 %v84, %v167
  %171 = vrot.lane.b32.xlu0 %v169, 4
  %v172 = vpop.permute.xlu0 %171
  %v174 = vsub.f32 %v101, %v172
  %176 = vrot.lane.b32.xlu0 %v174, 116
  %v177 = vpop.permute.xlu0 %176
  %v179 = vsel %vm146, %v177, 0.0
  %180 = vadd.xlane.f32.xlu0 %v179
  %v181 = vpop.xlane.xlu0 %180
  %v182 = vsub.f32 0.0, %v181
  %183 = vrot.lane.b32.xlu0 %v84, 112
  %v184 = vpop.permute.xlu0 %183
  %v186 = vmul.f32 %v84, %v184
  %188 = vrot.lane.b32.xlu0 %v186, 124
  %v189 = vpop.permute.xlu0 %188
  %v191 = vadd.f32 %v186, %v189
  %193 = vrot.lane.b32.xlu0 %v191, 120
  %v194 = vpop.permute.xlu0 %193
  %v196 = vsel %vm146, %v194, 0.0
  %197 = vadd.xlane.f32.xlu0 %v196
  %v198 = vpop.xlane.xlu0 %197
  %199 = vrot.lane.b32.xlu0 %v84, 108
  %v200 = vpop.permute.xlu0 %199
  %v202 = vmul.f32 %v84, %v200
  %204 = vrot.lane.b32.xlu0 %v202, 4
  %v205 = vpop.permute.xlu0 %204
  %v207 = vsub.f32 %v169, %v205
  %209 = vrot.lane.b32.xlu0 %v207, 116
  %v210 = vpop.permute.xlu0 %209
  %v212 = vsel %vm146, %v210, 0.0
  %213 = vadd.xlane.f32.xlu0 %v212
  %v214 = vpop.xlane.xlu0 %213
  %v215 = vsub.f32 0.0, %v214
  %216 = vrot.lane.b32.xlu0 %v84, 104
  %v217 = vpop.permute.xlu0 %216
  %v219 = vmul.f32 %v84, %v217
  %221 = vrot.lane.b32.xlu0 %v219, 124
  %v222 = vpop.permute.xlu0 %221
  %v224 = vadd.f32 %v219, %v222
  %226 = vrot.lane.b32.xlu0 %v224, 120
  %v227 = vpop.permute.xlu0 %226
  %v229 = vsel %vm146, %v227, 0.0
  %230 = vadd.xlane.f32.xlu0 %v229
  %v231 = vpop.xlane.xlu0 %230
  %232 = vrot.lane.b32.xlu0 %v84, 100
  %v233 = vpop.permute.xlu0 %232
  %v235 = vmul.f32 %v84, %v233
  %237 = vrot.lane.b32.xlu0 %v235, 4
  %v238 = vpop.permute.xlu0 %237
  %v240 = vsub.f32 %v202, %v238
  %242 = vrot.lane.b32.xlu0 %v240, 116
  %v243 = vpop.permute.xlu0 %242
  %v245 = vsel %vm146, %v243, 0.0
  %246 = vadd.xlane.f32.xlu0 %v245
  %v247 = vpop.xlane.xlu0 %246
  %v248 = vsub.f32 0.0, %v247
  %249 = vrot.lane.b32.xlu0 %v141, 112
  %v250 = vpop.permute.xlu0 %249
  %v252 = vsel %vm146, %v250, 0.0
  %253 = vadd.xlane.f32.xlu0 %v252
  %v254 = vpop.xlane.xlu0 %253
  %255 = vrot.lane.b32.xlu0 %v158, 112
  %v256 = vpop.permute.xlu0 %255
  %v258 = vsel %vm146, %v256, 0.0
  %259 = vadd.xlane.f32.xlu0 %v258
  %v260 = vpop.xlane.xlu0 %259
  %261 = vrot.lane.b32.xlu0 %v174, 108
  %v262 = vpop.permute.xlu0 %261
  %v264 = vsel %vm146, %v262, 0.0
  %265 = vadd.xlane.f32.xlu0 %v264
  %v266 = vpop.xlane.xlu0 %265
  %v267 = vsub.f32 0.0, %v266
  %268 = vrot.lane.b32.xlu0 %v191, 112
  %v269 = vpop.permute.xlu0 %268
  %v271 = vsel %vm146, %v269, 0.0
  %272 = vadd.xlane.f32.xlu0 %v271
  %v273 = vpop.xlane.xlu0 %272
  %274 = vrot.lane.b32.xlu0 %v207, 108
  %v275 = vpop.permute.xlu0 %274
  %v277 = vsel %vm146, %v275, 0.0
  %278 = vadd.xlane.f32.xlu0 %v277
  %v279 = vpop.xlane.xlu0 %278
  %v280 = vsub.f32 0.0, %v279
  %281 = vrot.lane.b32.xlu0 %v141, 104
  %v282 = vpop.permute.xlu0 %281
  %v284 = vsel %vm146, %v282, 0.0
  %285 = vadd.xlane.f32.xlu0 %v284
  %v286 = vpop.xlane.xlu0 %285
  %287 = vrot.lane.b32.xlu0 %v158, 104
  %v288 = vpop.permute.xlu0 %287
  %v290 = vsel %vm146, %v288, 0.0
  %291 = vadd.xlane.f32.xlu0 %v290
  %v292 = vpop.xlane.xlu0 %291
  %293 = vrot.lane.b32.xlu0 %v174, 100
  %v294 = vpop.permute.xlu0 %293
  %v296 = vsel %vm146, %v294, 0.0
  %297 = vadd.xlane.f32.xlu0 %v296
  %v298 = vpop.xlane.xlu0 %297
  %v299 = vsub.f32 0.0, %v298
  %300 = vrot.lane.b32.xlu0 %v141, 96
  %v301 = vpop.permute.xlu0 %300
  %v303 = vsel %vm146, %v301, 0.0
  %304 = vadd.xlane.f32.xlu0 %v303
  %v305 = vpop.xlane.xlu0 %304
  %vm306 = vcmask 7168
  %v307 = vsel %vm306, %v96, %v109
  %v308 = vsel %vm93, %v307, %v109
  %vm309 = vcmask 23552
  %v310 = vsel %vm309, %v308, %v137
  %v311 = vsel %vm146, %v310, 0.0
  %vm312 = vcmask 39936
  %v313 = vsel %vm312, %v311, %v129
  %vm314 = vcmask 48128
  %v315 = vsel %vm314, %v313, %v130
  %vm316 = vcmask 56320
  %v317 = vsel %vm316, %v315, 0.0
  %v318 = vsel %vm13, %v317, %v149
  %vm319 = vcmask 72704
  %v320 = vsel %vm319, %v318, %v165
  %vm321 = vcmask 80896
  %v322 = vsel %vm321, %v320, %v198
  %vm323 = vcmask 89088
  %v324 = vsel %vm323, %v322, %v231
  %vm325 = vcmask 97280
  %v326 = vsel %vm325, %v324, %v165
  %vm327 = vcmask 105472
  %v328 = vsel %vm327, %v326, %v254
  %vm329 = vcmask 113664
  %v330 = vsel %vm329, %v328, %v260
  %vm331 = vcmask 121856
  %v332 = vsel %vm331, %v330, %v273
  %v333 = vsel %vm306, %v198, %v260
  %v334 = vsel %vm93, %v333, %v286
  %v335 = vsel %vm309, %v334, %v292
  %v336 = vsel %vm146, %v335, %v231
  %v337 = vsel %vm312, %v336, %v273
  %v338 = vsel %vm314, %v337, %v292
  %v339 = vsel %vm316, %v338, %v305
  %v340 = vsel %vm13, %v339, 0.0
  %v341 = vsel %vm319, %v340, %v181
  %v342 = vsel %vm321, %v341, %v214
  %v343 = vsel %vm323, %v342, %v247
  %v344 = vsel %vm325, %v343, %v182
  %v345 = vsel %vm327, %v344, 0.0
  %v346 = vsel %vm329, %v345, %v266
  %v347 = vsel %vm331, %v346, %v279
  %v348 = vsel %vm306, %v215, %v267
  %v349 = vsel %vm93, %v348, 0.0
  %v350 = vsel %vm309, %v349, %v298
  %v351 = vsel %vm146, %v350, %v248
  %v352 = vsel %vm312, %v351, %v280
  %v353 = vsel %vm314, %v352, %v299
  %v354 = vsel %vm316, %v353, 0.0
  %v355 = vsel %vm13, %v354, 0.0
  %357 = vrot.lane.b32.xlu0 %v347, 16
  %v358 = vpop.permute.xlu0 %357
  %361 = vrot.lane.b32.xlu0 %v355, 32
  %v362 = vpop.permute.xlu0 %361
  %vm364 = vcmask 130048
  %v365 = vsel %vm364, %v332, %v358
  %vm366 = vcmask 261120
  %v367 = vsel %vm366, %v365, %v362
  %368 = vst [vmem:[%s2] sm:$0xff] %v367
  // Predicated region
  $region10: #{spectral_forward.1} parent=0 // pred_check
    _
  $region11: #{spectral_forward.1} parent=0 // pred_check_branch
    %370 = sbr.rel (0) target = $region13
  $region12: #{spectral_forward.1} parent=0 // pred_region
    _
  $region13: #{spectral_forward.1} parent=0 // pred_fallthru
    _
  // Predicated region
  $region14: #{spectral_forward.1} parent=0 // pred_check
    _
  $region15: #{spectral_forward.1} parent=0 // pred_check_branch
    %372 = sbr.rel (0) target = $region17
  $region16: #{spectral_forward.1} parent=0 // pred_region
    _
  $region17: #{spectral_forward.1} parent=0 // pred_fallthru
    _

</llo_original>
